<compile_context>
chip_gen: v5e
topology: v5e:2x2
jax: 0.10.0
libtpu: 0.0.40
codegen_flags: <defaults>
</compile_context>

<pallas_src>
import functools

import jax
import jax.numpy as jnp
import numpy as np
from jax import lax
from jax.experimental import pallas as pl
from jax.experimental.pallas import tpu as pltpu


def _elu_plus_one(t):
    # F.elu(t) + 1  (alpha = 1), computed in f32
    return jnp.where(t > 0, t + 1.0, jnp.exp(t))


def _layernorm(t, gamma, beta, eps=1e-5):
    mu = jnp.mean(t, axis=-1, keepdims=True)
    var = jnp.mean((t - mu) ** 2, axis=-1, keepdims=True)
    return (t - mu) * lax.rsqrt(var + eps) * gamma + beta


def _rotate_half_deinterleaved(t, c_half):
    # In the de-interleaved (evens-first) channel layout the interleaved rotary
    # "rotate half" becomes a half-shift with a sign flip: two lane slices +
    # concat (VPU/XLU work only; no MXU matmul, no dense rotation matrix).
    return jnp.concatenate([-t[:, c_half:], t[:, :c_half]], axis=-1)


# ---------------------------------------------------------------------------
# Pass 1: accumulate block-diagonal kv (C, C) and ksum (1, C) per batch.
# ---------------------------------------------------------------------------
def _kv_kernel(src_ref, kcos_ref, ksin_ref, wkv_ref, mask_ref,
               kv_out_ref, ksum_out_ref, kv_acc, ksum_acc, *, C):
    s = pl.program_id(1)

    @pl.when(s == 0)
    def _():
        kv_acc[...] = jnp.zeros_like(kv_acc)
        ksum_acc[...] = jnp.zeros_like(ksum_acc)

    src = src_ref[0]                                        # (TS, C) f32
    proj = jnp.dot(src.astype(jnp.bfloat16), wkv_ref[...],
                   preferred_element_type=jnp.float32)      # (TS, 2C) f32
    k = proj[:, :C]                                         # de-interleaved layout
    v = proj[:, C:]                                         # original layout
    k2 = _rotate_half_deinterleaved(k, C // 2)
    k_pos = k * kcos_ref[0] + k2 * ksin_ref[0]
    kf = _elu_plus_one(k_pos)                               # f32, > 0

    kv_acc[...] += jnp.dot(kf.T.astype(jnp.bfloat16), v.astype(jnp.bfloat16),
                           preferred_element_type=jnp.float32)
    ksum_acc[...] += jnp.sum(kf, axis=0, keepdims=True)

    @pl.when(s == pl.num_programs(1) - 1)
    def _():
        kv_out_ref[0] = kv_acc[...] * mask_ref[...]         # block-diag head mask
        ksum_out_ref[0] = ksum_acc[...]


# ---------------------------------------------------------------------------
# Pass 2: per L-tile attention output + merge + norm1 + MLP + norm2 + residual.
# ---------------------------------------------------------------------------
def _attn_kernel(x_ref, qcos_ref, qsin_ref, kv_ref, ksum_ref, mask_ref,
                 wq_ref, wm_ref, w1a_ref, w1b_ref, w2_ref,
                 g1_ref, b1_ref, g2_ref, b2_ref, out_ref, *, C):
    x = x_ref[0]                                            # (TL, C) f32
    x_b = x.astype(jnp.bfloat16)

    q = jnp.dot(x_b, wq_ref[...], preferred_element_type=jnp.float32)
    q2 = _rotate_half_deinterleaved(q, C // 2)
    q_pos = q * qcos_ref[0] + q2 * qsin_ref[0]
    qf = _elu_plus_one(q_pos)                               # f32

    # Linear attention, all heads at once:
    #   numerator   = qf @ kv_blockdiag        (single full-width bf16 matmul)
    #   denominator = (qf * ksum) @ head_mask  (kept in f32)
    num = jnp.dot(qf.astype(jnp.bfloat16), kv_ref[0].astype(jnp.bfloat16),
                  preferred_element_type=jnp.float32)       # (TL, C)
    denom = jnp.dot(qf * ksum_ref[0], mask_ref[...],
                    preferred_element_type=jnp.float32) + 1e-6
    msg = num * pl.reciprocal(denom, approx=True)           # (TL, C)

    # merge + norm1
    msg = jnp.dot(msg.astype(jnp.bfloat16), wm_ref[...],
                  preferred_element_type=jnp.float32)
    msg = _layernorm(msg, g1_ref[...], b1_ref[...])

    # MLP on cat([x, msg]) without materializing the concat: W1 split in two.
    hidden = jnp.dot(x_b, w1a_ref[...], preferred_element_type=jnp.float32)
    hidden = hidden + jnp.dot(msg.astype(jnp.bfloat16), w1b_ref[...],
                              preferred_element_type=jnp.float32)
    hidden = jnp.maximum(hidden, 0.0)
    ff = jnp.dot(hidden.astype(jnp.bfloat16), w2_ref[...],
                 preferred_element_type=jnp.float32)
    ff = _layernorm(ff, g2_ref[...], b2_ref[...])

    out_ref[0] = (x + ff).astype(out_ref.dtype)


def _pick_tile(n, cap=512):
    """Largest tile <= cap that evenly divides n (multiple of 8 when tiling)."""
    if n <= cap:
        return n
    for t in range(cap, 7, -1):
        if n % t == 0 and t % 8 == 0:
            return t
    return n


def loftr_encoder_layer(x, source, x_pe, source_pe, params, nhead):
    """Pallas implementation of LoFTREncoderLayer.forward (attention='linear', no masks)."""
    N, L, C = x.shape
    S = source.shape[1]
    D = C // nhead
    assert D % 2 == 0 and C % 2 == 0

    wq, wk, wv, wm, w1, w2, g1, b1, g2, b2 = params

    # De-interleave permutation (evens first, then odds).  Folding it into the
    # Q/K projection columns and the cos/sin tables turns the interleaved
    # rotary into a simple half-roll + sign; linear attention is invariant to
    # a per-channel permutation of Q/K as long as the head mask below tracks
    # which original head each permuted channel belongs to.
    perm = np.concatenate([np.arange(0, C, 2), np.arange(1, C, 2)])
    head_of_perm = perm // D
    head_mask = (head_of_perm[:, None] == (np.arange(C) // D)[None, :])
    head_mask = jnp.asarray(head_mask.astype(np.float32))             # (C, C)

    # torch Linear: y = x @ W.T with W (out, in) -> pre-transpose to (in, out).
    wq_p = jnp.asarray(wq).T[:, perm].astype(jnp.bfloat16)            # (C, C)
    wk_p = jnp.asarray(wk).T[:, perm]
    wv_t = jnp.asarray(wv).T
    wkv = jnp.concatenate([wk_p, wv_t], axis=1).astype(jnp.bfloat16)  # (C, 2C)
    wm_t = jnp.asarray(wm).T.astype(jnp.bfloat16)                     # (C, C)
    w1_t = jnp.asarray(w1).T                                          # (2C, 2C)
    w1a = w1_t[:C, :].astype(jnp.bfloat16)                            # (C, 2C)
    w1b = w1_t[C:, :].astype(jnp.bfloat16)                            # (C, 2C)
    w2_t = jnp.asarray(w2).T.astype(jnp.bfloat16)                     # (2C, C)
    g1_2d, b1_2d = g1.reshape(1, C), b1.reshape(1, C)
    g2_2d, b2_2d = g2.reshape(1, C), b2.reshape(1, C)

    qcos = x_pe[..., 0][..., perm]
    qsin = x_pe[..., 1][..., perm]
    kcos = source_pe[..., 0][..., perm]
    ksin = source_pe[..., 1][..., perm]

    TS = _pick_tile(S)
    TL = _pick_tile(L)
    n_st = S // TS
    n_lt = L // TL

    def seq_spec(tile):
        return pl.BlockSpec((1, tile, C), lambda b, t: (b, t, 0))

    def const_spec(arr):
        nd = arr.ndim
        return pl.BlockSpec(arr.shape, lambda b, t, _nd=nd: (0,) * _nd)

    vmem_limit = 48 * 1024 * 1024  # safe on v7x's 64 MiB/TC, generous on v5e/v6e

    # --- Pass 1: per-batch kv / ksum (source side, tiled + accumulated) -----
    kv, ksum = pl.pallas_call(
        functools.partial(_kv_kernel, C=C),
        out_shape=(jax.ShapeDtypeStruct((N, C, C), jnp.float32),
                   jax.ShapeDtypeStruct((N, 1, C), jnp.float32)),
        grid=(N, n_st),
        in_specs=[seq_spec(TS), seq_spec(TS), seq_spec(TS),
                  const_spec(wkv), const_spec(head_mask)],
        out_specs=[pl.BlockSpec((1, C, C), lambda b, t: (b, 0, 0)),
                   pl.BlockSpec((1, 1, C), lambda b, t: (b, 0, 0))],
        scratch_shapes=[pltpu.VMEM((C, C), jnp.float32),
                        pltpu.VMEM((1, C), jnp.float32)],
        compiler_params=pltpu.CompilerParams(
            dimension_semantics=("parallel", "arbitrary"),
            vmem_limit_bytes=vmem_limit),
    )(source, kcos, ksin, wkv, head_mask)

    # --- Pass 2: query side, tiled over L, fully parallel grid --------------
    out = pl.pallas_call(
        functools.partial(_attn_kernel, C=C),
        out_shape=jax.ShapeDtypeStruct((N, L, C), x.dtype),
        grid=(N, n_lt),
        in_specs=[seq_spec(TL), seq_spec(TL), seq_spec(TL),
                  pl.BlockSpec((1, C, C), lambda b, t: (b, 0, 0)),
                  pl.BlockSpec((1, 1, C), lambda b, t: (b, 0, 0)),
                  const_spec(head_mask),
                  const_spec(wq_p), const_spec(wm_t),
                  const_spec(w1a), const_spec(w1b), const_spec(w2_t),
                  const_spec(g1_2d), const_spec(b1_2d),
                  const_spec(g2_2d), const_spec(b2_2d)],
        out_specs=pl.BlockSpec((1, TL, C), lambda b, t: (b, t, 0)),
        compiler_params=pltpu.CompilerParams(
            dimension_semantics=("parallel", "parallel"),
            vmem_limit_bytes=vmem_limit),
    )(x, qcos, qsin, kv, ksum, head_mask,
      wq_p, wm_t, w1a, w1b, w2_t, g1_2d, b1_2d, g2_2d, b2_2d)
    return out


def ref_forward(x, source, x_pe, source_pe, params, nhead):
    """Pure-JAX f32 reference replicating the PyTorch forward exactly."""
    N, L, C = x.shape
    S = source.shape[1]
    d = C // nhead
    wq, wk, wv, wm, w1, w2, g1, b1, g2, b2 = params

    q = x @ wq.T
    k = source @ wk.T
    v = source @ wv.T

    def embed_rotary(t, cos, sin):
        t2 = jnp.stack([-t[..., 1::2], t[..., 0::2]], axis=-1).reshape(t.shape)
        return t * cos + t2 * sin

    Q = embed_rotary(q, x_pe[..., 0], x_pe[..., 1])
    K = embed_rotary(k, source_pe[..., 0], source_pe[..., 1])

    Qh = Q.reshape(N, L, nhead, d)
    Kh = K.reshape(N, S, nhead, d)
    Vh = v.reshape(N, S, nhead, d)

    Qf = jnp.where(Qh > 0, Qh + 1.0, jnp.exp(Qh))
    Kf = jnp.where(Kh > 0, Kh + 1.0, jnp.exp(Kh))
    Vs = Vh / S
    KV = jnp.einsum('nshd,nshv->nhdv', Kf, Vs)
    Z = 1.0 / (jnp.einsum('nlhd,nhd->nlh', Qf, Kf.sum(axis=1)) + 1e-6)
    msg = jnp.einsum('nlhd,nhdv,nlh->nlhv', Qf, KV, Z) * S

    msg = msg.reshape(N, L, C) @ wm.T

    def ln(t, g, b):
        mu = t.mean(-1, keepdims=True)
        var = ((t - mu) ** 2).mean(-1, keepdims=True)
        return (t - mu) / jnp.sqrt(var + 1e-5) * g + b

    msg = ln(msg, g1, b1)
    cat = jnp.concatenate([x, msg], axis=-1)
    msg = jnp.maximum(cat @ w1.T, 0.0) @ w2.T
    msg = ln(msg, g2, b2)
    return x + msg


if __name__ == "__main__":
    key = jax.random.PRNGKey(0)
    # d_model=128 (lane-dense), nhead=8 -> head dim 16
    N, L, S, C, H = 2, 64, 32, 128, 8

    ks = jax.random.split(key, 16)
    x = jax.random.normal(ks[0], (N, L, C), jnp.float32) * 0.5
    source = jax.random.normal(ks[1], (N, S, C), jnp.float32) * 0.5
    theta_q = jax.random.uniform(ks[2], (N, L, C), jnp.float32, 0.0, 2 * np.pi)
    theta_k = jax.random.uniform(ks[3], (N, S, C), jnp.float32, 0.0, 2 * np.pi)
    x_pe = jnp.stack([jnp.cos(theta_q), jnp.sin(theta_q)], axis=-1)       # [N, L, C, 2]
    source_pe = jnp.stack([jnp.cos(theta_k), jnp.sin(theta_k)], axis=-1)  # [N, S, C, 2]

    def w(k_, shape, scale=0.1):
        return jax.random.normal(k_, shape, jnp.float32) * scale

    params = (
        w(ks[4], (C, C)),             # q_proj.weight  (out, in)
        w(ks[5], (C, C)),             # k_proj.weight
        w(ks[6], (C, C)),             # v_proj.weight
        w(ks[7], (C, C)),             # merge.weight
        w(ks[8], (2 * C, 2 * C)),     # mlp[0].weight
        w(ks[9], (C, 2 * C)),         # mlp[2].weight
        1.0 + w(ks[10], (C,), 0.05),  # norm1.weight
        w(ks[11], (C,), 0.05),        # norm1.bias
        1.0 + w(ks[12], (C,), 0.05),  # norm2.weight
        w(ks[13], (C,), 0.05),        # norm2.bias
    )

    out = loftr_encoder_layer(x, source, x_pe, source_pe, params, H)
    out = jax.block_until_ready(out)

    ref = ref_forward(x, source, x_pe, source_pe, params, H)
    out_np, ref_np = np.asarray(out), np.asarray(ref)
    # bf16 matmul inputs (f32 accumulation) vs f32 reference: check aggregate
    # relative error and elementwise absolute error with safe margins.
    rel_l2 = np.linalg.norm(out_np - ref_np) / np.linalg.norm(ref_np)
    max_abs = np.max(np.abs(out_np - ref_np))
    assert rel_l2 < 2.5e-2, f"relative L2 error too large: {rel_l2}"
    assert max_abs < 1e-1, f"max abs error too large: {max_abs}"

    print("KERNEL_OK")
</pallas_src>

<mosaic_0001>
module attributes {stable_mosaic.version = 11 : i64} {
  func.func @_kv_kernel(%arg0: i32, %arg1: i32, %arg2: memref<1x32x128xf32, #tpu.memory_space<vmem>>, %arg3: memref<1x32x128xf32, #tpu.memory_space<vmem>>, %arg4: memref<1x32x128xf32, #tpu.memory_space<vmem>>, %arg5: memref<128x256xbf16, #tpu.memory_space<vmem>>, %arg6: memref<128x128xf32, #tpu.memory_space<vmem>>, %arg7: memref<1x128x128xf32, #tpu.memory_space<vmem>>, %arg8: memref<1x1x128xf32, #tpu.memory_space<vmem>>, %arg9: memref<128x128xf32, #tpu.memory_space<vmem>>, %arg10: memref<1x128xf32, #tpu.memory_space<vmem>>) attributes {dimension_semantics = [#tpu.dimension_semantics<parallel>, #tpu.dimension_semantics<arbitrary>], iteration_bounds = array<i64: 2, 1>, scalar_prefetch = 0 : i64, scratch_operands = 2 : i64, tpu.core_type = #tpu.core_type<tc>, window_params = [{transform_indices = @transform_0, window_bounds = array<i64: 1, 32, 128>}, {transform_indices = @transform_1, window_bounds = array<i64: 1, 32, 128>}, {transform_indices = @transform_2, window_bounds = array<i64: 1, 32, 128>}, {pipeline_mode = #tpu.pipeline_mode<synchronous>, transform_indices = @transform_3, window_bounds = array<i64: 128, 256>}, {pipeline_mode = #tpu.pipeline_mode<synchronous>, transform_indices = @transform_4, window_bounds = array<i64: 128, 128>}, {transform_indices = @transform_5, window_bounds = array<i64: 1, 128, 128>}, {transform_indices = @transform_6, window_bounds = array<i64: 1, 1, 128>}]} {
    %c0_i32 = arith.constant 0 : i32
    %0 = arith.cmpi eq, %arg1, %c0_i32 : i32
    %1 = arith.extui %0 : i1 to i32
    %c0_i32_0 = arith.constant 0 : i32
    %2 = arith.cmpi ne, %1, %c0_i32_0 : i32
    scf.if %2 {
      %cst_26 = arith.constant 0.000000e+00 : f32
      %43 = vector.broadcast %cst_26 : f32 to vector<128x128xf32>
      %c0_27 = arith.constant 0 : index
      %c0_28 = arith.constant 0 : index
      %44 = vector.load %arg9[%c0_27, %c0_28] : memref<128x128xf32, #tpu.memory_space<vmem>>, vector<128x128xf32>
      tpu.vector_store %arg9[%c0_27, %c0_28], %43 {strides = array<i32>} : memref<128x128xf32, #tpu.memory_space<vmem>>, vector<128x128xf32>,
      %cst_29 = arith.constant 0.000000e+00 : f32
      %45 = vector.broadcast %cst_29 : f32 to vector<1x128xf32>
      %c0_30 = arith.constant 0 : index
      %c0_31 = arith.constant 0 : index
      %46 = vector.load %arg10[%c0_30, %c0_31] : memref<1x128xf32, #tpu.memory_space<vmem>>, vector<1x128xf32>
      tpu.vector_store %arg10[%c0_30, %c0_31], %45 {strides = array<i32>} : memref<1x128xf32, #tpu.memory_space<vmem>>, vector<1x128xf32>,
    } else {
    }
    %c0 = arith.constant 0 : index
    %c0_1 = arith.constant 0 : index
    %c0_2 = arith.constant 0 : index
    %3 = vector.load %arg2[%c0, %c0_1, %c0_2] : memref<1x32x128xf32, #tpu.memory_space<vmem>>, vector<1x32x128xf32>
    %4 = vector.shape_cast %3 : vector<1x32x128xf32> to vector<32x128xf32>
    %5 = arith.truncf %4 : vector<32x128xf32> to vector<32x128xbf16>
    %c0_3 = arith.constant 0 : index
    %c0_4 = arith.constant 0 : index
    %6 = vector.load %arg5[%c0_3, %c0_4] : memref<128x256xbf16, #tpu.memory_space<vmem>>, vector<128x256xbf16>
    %cst = arith.constant dense<0.000000e+00> : vector<32x256xf32>
    %7 = tpu.matmul %5, %6, %cst {dimension_numbers = #tpu.dot_dimension_numbers<[1], [0], [0], [1], [0, 0, 1, 1], [], []>} : vector<32x128xbf16>, vector<128x256xbf16>, vector<32x256xf32> -> vector<32x256xf32>
    %8 = vector.extract_strided_slice %7 {offsets = [0, 0], sizes = [32, 128], strides = [1, 1]} : vector<32x256xf32> to vector<32x128xf32>
    %9 = vector.extract_strided_slice %7 {offsets = [0, 128], sizes = [32, 128], strides = [1, 1]} : vector<32x256xf32> to vector<32x128xf32>
    %10 = vector.extract_strided_slice %8 {offsets = [0, 64], sizes = [32, 64], strides = [1, 1]} : vector<32x128xf32> to vector<32x64xf32>
    %cst_5 = arith.constant 0.000000e+00 : f32
    %11 = vector.broadcast %cst_5 : f32 to vector<32x64xf32>
    %12 = arith.subf %11, %10 : vector<32x64xf32>
    %13 = vector.extract_strided_slice %8 {offsets = [0, 0], sizes = [32, 64], strides = [1, 1]} : vector<32x128xf32> to vector<32x64xf32>
    %14 = tpu.concatenate %12, %13 in 1 : vector<32x64xf32>, vector<32x64xf32> -> vector<32x128xf32>
    %c0_6 = arith.constant 0 : index
    %c0_7 = arith.constant 0 : index
    %c0_8 = arith.constant 0 : index
    %15 = vector.load %arg3[%c0_6, %c0_7, %c0_8] : memref<1x32x128xf32, #tpu.memory_space<vmem>>, vector<1x32x128xf32>
    %16 = vector.shape_cast %15 : vector<1x32x128xf32> to vector<32x128xf32>
    %17 = arith.mulf %8, %16 : vector<32x128xf32>
    %c0_9 = arith.constant 0 : index
    %c0_10 = arith.constant 0 : index
    %c0_11 = arith.constant 0 : index
    %18 = vector.load %arg4[%c0_9, %c0_10, %c0_11] : memref<1x32x128xf32, #tpu.memory_space<vmem>>, vector<1x32x128xf32>
    %19 = vector.shape_cast %18 : vector<1x32x128xf32> to vector<32x128xf32>
    %20 = arith.mulf %14, %19 : vector<32x128xf32>
    %21 = arith.addf %17, %20 : vector<32x128xf32>
    %cst_12 = arith.constant 0.000000e+00 : f32
    %22 = vector.broadcast %cst_12 : f32 to vector<32x128xf32>
    %23 = arith.cmpf ogt, %21, %22 : vector<32x128xf32>
    %cst_13 = arith.constant 1.000000e+00 : f32
    %24 = vector.broadcast %cst_13 : f32 to vector<32x128xf32>
    %25 = arith.addf %21, %24 : vector<32x128xf32>
    %26 = math.exp %21 : vector<32x128xf32>
    %27 = arith.select %23, %25, %26 : vector<32x128xi1>, vector<32x128xf32>
    %c0_14 = arith.constant 0 : index
    %c0_15 = arith.constant 0 : index
    %28 = vector.load %arg9[%c0_14, %c0_15] : memref<128x128xf32, #tpu.memory_space<vmem>>, vector<128x128xf32>
    %29 = tpu.transpose %27, [1, 0] : vector<32x128xf32> -> vector<128x32xf32>
    %30 = arith.truncf %29 : vector<128x32xf32> to vector<128x32xbf16>
    %31 = arith.truncf %9 : vector<32x128xf32> to vector<32x128xbf16>
    %cst_16 = arith.constant dense<0.000000e+00> : vector<128x128xf32>
    %32 = tpu.matmul %30, %31, %cst_16 {dimension_numbers = #tpu.dot_dimension_numbers<[1], [0], [0], [1], [0, 0, 1, 1], [], []>} : vector<128x32xbf16>, vector<32x128xbf16>, vector<128x128xf32> -> vector<128x128xf32>
    %33 = arith.addf %28, %32 : vector<128x128xf32>
    %c0_17 = arith.constant 0 : index
    %c0_18 = arith.constant 0 : index
    %34 = vector.load %arg9[%c0_17, %c0_18] : memref<128x128xf32, #tpu.memory_space<vmem>>, vector<128x128xf32>
    tpu.vector_store %arg9[%c0_17, %c0_18], %33 {strides = array<i32>} : memref<128x128xf32, #tpu.memory_space<vmem>>, vector<128x128xf32>,
    %c0_19 = arith.constant 0 : index
    %c0_20 = arith.constant 0 : index
    %35 = vector.load %arg10[%c0_19, %c0_20] : memref<1x128xf32, #tpu.memory_space<vmem>>, vector<1x128xf32>
    %cst_21 = arith.constant dense<0.000000e+00> : vector<128xf32>
    %36 = vector.multi_reduction <add>, %27, %cst_21 [0] : vector<32x128xf32> to vector<128xf32>
    %37 = vector.shape_cast %36 : vector<128xf32> to vector<1x128xf32>
    %38 = arith.addf %35, %37 : vector<1x128xf32>
    %c0_22 = arith.constant 0 : index
    %c0_23 = arith.constant 0 : index
    %39 = vector.load %arg10[%c0_22, %c0_23] : memref<1x128xf32, #tpu.memory_space<vmem>>, vector<1x128xf32>
    tpu.vector_store %arg10[%c0_22, %c0_23], %38 {strides = array<i32>} : memref<1x128xf32, #tpu.memory_space<vmem>>, vector<1x128xf32>,
    %c0_i32_24 = arith.constant 0 : i32
    %40 = arith.cmpi eq, %arg1, %c0_i32_24 : i32
    %41 = arith.extui %40 : i1 to i32
    %c0_i32_25 = arith.constant 0 : i32
    %42 = arith.cmpi ne, %41, %c0_i32_25 : i32
    scf.if %42 {
      %c0_26 = arith.constant 0 : index
      %c0_27 = arith.constant 0 : index
      %43 = vector.load %arg9[%c0_26, %c0_27] : memref<128x128xf32, #tpu.memory_space<vmem>>, vector<128x128xf32>
      %c0_28 = arith.constant 0 : index
      %c0_29 = arith.constant 0 : index
      %44 = vector.load %arg6[%c0_28, %c0_29] : memref<128x128xf32, #tpu.memory_space<vmem>>, vector<128x128xf32>
      %45 = arith.mulf %43, %44 : vector<128x128xf32>
      %c0_30 = arith.constant 0 : index
      %c0_31 = arith.constant 0 : index
      %c0_32 = arith.constant 0 : index
      %46 = vector.load %arg7[%c0_30, %c0_31, %c0_32] : memref<1x128x128xf32, #tpu.memory_space<vmem>>, vector<1x128x128xf32>
      %47 = vector.shape_cast %46 : vector<1x128x128xf32> to vector<128x128xf32>
      %48 = vector.shape_cast %45 : vector<128x128xf32> to vector<1x128x128xf32>
      tpu.vector_store %arg7[%c0_30, %c0_31, %c0_32], %48 {strides = array<i32>} : memref<1x128x128xf32, #tpu.memory_space<vmem>>, vector<1x128x128xf32>,
      %c0_33 = arith.constant 0 : index
      %c0_34 = arith.constant 0 : index
      %49 = vector.load %arg10[%c0_33, %c0_34] : memref<1x128xf32, #tpu.memory_space<vmem>>, vector<1x128xf32>
      %c0_35 = arith.constant 0 : index
      %c0_36 = arith.constant 0 : index
      %c0_37 = arith.constant 0 : index
      %50 = vector.load %arg8[%c0_35, %c0_36, %c0_37] : memref<1x1x128xf32, #tpu.memory_space<vmem>>, vector<1x1x128xf32>
      %51 = vector.shape_cast %50 : vector<1x1x128xf32> to vector<1x128xf32>
      %52 = vector.shape_cast %49 : vector<1x128xf32> to vector<1x1x128xf32>
      tpu.vector_store %arg8[%c0_35, %c0_36, %c0_37], %52 {strides = array<i32>} : memref<1x1x128xf32, #tpu.memory_space<vmem>>, vector<1x1x128xf32>,
    } else {
    }
    return
  }
  func.func @transform_0(%arg0: i32, %arg1: i32) -> (i32, i32, i32) {
    %c0_i32 = arith.constant 0 : i32
    %c0_i32_0 = arith.constant 0 : i32
    return %arg0, %arg1, %c0_i32 : i32, i32, i32
  }
  func.func @transform_1(%arg0: i32, %arg1: i32) -> (i32, i32, i32) {
    %c0_i32 = arith.constant 0 : i32
    %c0_i32_0 = arith.constant 0 : i32
    return %arg0, %arg1, %c0_i32 : i32, i32, i32
  }
  func.func @transform_2(%arg0: i32, %arg1: i32) -> (i32, i32, i32) {
    %c0_i32 = arith.constant 0 : i32
    %c0_i32_0 = arith.constant 0 : i32
    return %arg0, %arg1, %c0_i32 : i32, i32, i32
  }
  func.func @transform_3(%arg0: i32, %arg1: i32) -> (i32, i32) {
    %c0_i32 = arith.constant 0 : i32
    %c0_i32_0 = arith.constant 0 : i32
    %c0_i32_1 = arith.constant 0 : i32
    return %c0_i32, %c0_i32_0 : i32, i32
  }
  func.func @transform_4(%arg0: i32, %arg1: i32) -> (i32, i32) {
    %c0_i32 = arith.constant 0 : i32
    %c0_i32_0 = arith.constant 0 : i32
    %c0_i32_1 = arith.constant 0 : i32
    return %c0_i32, %c0_i32_0 : i32, i32
  }
  func.func @transform_5(%arg0: i32, %arg1: i32) -> (i32, i32, i32) {
    %c0_i32 = arith.constant 0 : i32
    %c0_i32_0 = arith.constant 0 : i32
    %c0_i32_1 = arith.constant 0 : i32
    return %arg0, %c0_i32, %c0_i32_0 : i32, i32, i32
  }
  func.func @transform_6(%arg0: i32, %arg1: i32) -> (i32, i32, i32) {
    %c0_i32 = arith.constant 0 : i32
    %c0_i32_0 = arith.constant 0 : i32
    %c0_i32_1 = arith.constant 0 : i32
    return %arg0, %c0_i32, %c0_i32_0 : i32, i32, i32
  }
}

</mosaic_0001>

<llo_original>
// kernel: tpu_custom_call.1
$region0: #{tpu_custom_call.1}
  #allocation0 [shape = 'u32[]', space=smem, size = 0x4, offset = 0x4, fixed_abs, tag = 'smem constant byte address 0x4 - core index']
  #allocation1 [shape = 'u32[72,128]{1,0:T(1,128)}', space=vmem, size = 0x9000, scoped, tag = 'internal scratch']
  #allocation2 [shape = 'f32[128,128]{1,0:T(8,128)}', space=vmem, size = 0x10000, scoped, tag = 'scratch operand']
  #allocation3 [shape = 'f32[1,128]{1,0:T(1,128)}', space=vmem, size = 0x200, scoped, tag = 'scratch operand']
  %s0 = inlined_call_operand.hbm [shape: f32[2,32,128], index: 0, kind: input, shape index: {}]
  %s1 = inlined_call_operand.hbm [shape: f32[2,32,128], index: 1, kind: input, shape index: {}]
  %s2 = inlined_call_operand.hbm [shape: f32[2,32,128], index: 2, kind: input, shape index: {}]
  %s3 = inlined_call_operand.hbm [shape: bf16[128,256], index: 3, kind: input, shape index: {}]
  %s4 = inlined_call_operand.hbm [shape: f32[128,128], index: 4, kind: input, shape index: {}]
  %s5 = inlined_call_operand.hbm [shape: f32[2,128,128], index: 5, kind: output, shape index: {0}]
  %s6 = inlined_call_operand.hbm [shape: f32[2,1,128], index: 6, kind: output, shape index: {1}]
  %7 = xla_tuple %s5, %s6
  %s8 = sld [smem:[#allocation0]]
  $region89: #{tpu_custom_call.1} parent=0
    _
  %s10 = ssub.s32 1, %s8
  %s11 = scalar_select 0, %s10, %s8
  $region1: #{tpu_custom_call.1} parent=0
    #allocation4 [shape = 'u8[32768]{0}', space=vmem, size = 0x8000, scoped, tag = 'input window, operand 0']
    #allocation5 [shape = 's32[2]{0}', space=sflag, size = 0x8, scoped, tag = 'scoped memory for tpu_custom_call.1']
    #allocation6 [shape = 's32[2]{0}', space=sflag, size = 0x8, scoped, tag = 'scoped memory for tpu_custom_call.1']
    #allocation7 [shape = 'u8[32768]{0}', space=vmem, size = 0x8000, scoped, tag = 'input window, operand 1']
    #allocation8 [shape = 's32[2]{0}', space=sflag, size = 0x8, scoped, tag = 'scoped memory for tpu_custom_call.1']
    #allocation9 [shape = 'u8[32768]{0}', space=vmem, size = 0x8000, scoped, tag = 'input window, operand 2']
    #allocation10 [shape = 'u8[65536]{0}', space=vmem, size = 0x10000, scoped, tag = 'input window, operand 3, single buffered']
    #allocation11 [shape = 's32[1]{0}', space=sflag, size = 0x4, scoped, tag = 'scoped memory for tpu_custom_call.1']
    #allocation12 [shape = 'u8[65536]{0}', space=vmem, size = 0x10000, scoped, tag = 'input window, operand 4, single buffered']
    #allocation13 [shape = 'u8[131072]{0}', space=vmem, size = 0x20000, scoped, tag = 'output window, operand 0']
    #allocation14 [shape = 'u8[1024]{0}', space=vmem, size = 0x400, scoped, tag = 'output window, operand 1']
    #allocation15 [shape = 's32[2]{0}', space=sflag, size = 0x8, scoped, tag = 'scoped memory for tpu_custom_call.1']
    %12 = vsyncpa [#allocation5], 0
    %s13 = scalar_lea.sflag [#allocation5], 1
    %14 = vsyncpa %s13, 0
    %15 = vsyncpa [#allocation8], 0
    %s16 = scalar_lea.sflag [#allocation8], 1
    %17 = vsyncpa %s16, 0
    %18 = vsyncpa [#allocation11], 0
    %19 = vsyncpa [#allocation6], 0
    %s20 = scalar_lea.sflag [#allocation6], 1
    %21 = vsyncpa %s20, 0
    %22 = vsyncpa [#allocation15], 0
    %s23 = scalar_lea.sflag [#allocation15], 1
    %24 = vsyncpa %s23, 0
    loop: start=0, step=1, limit=4
    $region2: #{tpu_custom_call.1} parent=1 // loop_pre_header
      _
    $region3: #{tpu_custom_call.1} parent=1 // loop_header
      %s26 = sphi 0, %s30
      %p27 = scmp.ge.s32.totalorder %s26, 4
      %s33 = sphi 0, %s45
      %s34 = sphi 0, %s41
      %s35 = sphi 0, %s33
      %s36 = sphi 0, %s34
      %s37 = sphi 0, %s35
      %s38 = sphi 0, %s36
      %s50 = sphi 0, %s52
      %s53 = sphi 0, %s50
      %s54 = sphi 0, %s53
      %s70 = sphi 0, %s54
      %s78 = sphi 0, %s80
      %s81 = sphi 0, %s78
      %s82 = sphi 0, %s81
      %s98 = sphi 0, %s82
      %s106 = sphi 0, %s108
      %s109 = sphi 0, %s106
      %s110 = sphi 0, %s109
      %s126 = sphi 0, %s110
      %s130 = sphi 0, %s130
      %s132 = sphi 0, %s130
      %s133 = sphi 0, %s132
      %s147 = sphi 0, %s133
      %s151 = sphi 0, %s151
      %s153 = sphi 0, %s151
      %s154 = sphi 0, %s153
      %s168 = sphi 0, %s154
      %s174 = sphi 0, %s176
      %s177 = sphi 0, %s174
      %s178 = sphi 0, %s177
      %s194 = sphi 0, %s178
      %s200 = sphi 0, %s202
      %s203 = sphi 0, %s200
      %s204 = sphi 0, %s203
      %s220 = sphi 0, %s204
    $region4: #{tpu_custom_call.1} parent=1 // loop_header_branch
      %29 = sbr.rel (%p27) target = $region8
    $region5: #{tpu_custom_call.1} parent=1 // loop_body
      %s31 = ssub.s32 %s26, 1
      %s32 = ssub.s32 %s26, 2
      %s39 = sadd.s32 1, %s34
      %p40 = scmp.ge.s32.totalorder %s39, 1
      %s41 = scalar_select %p40, 0, %s39
      %s42 = sadd.s32 1, %s33
      %s43 = scalar_select %p40, %s42, %s33
      %p44 = scmp.ge.s32.totalorder %s43, 2
      %s45 = scalar_select %p44, 0, %s43
      %s46 = ssub.s32 %s33, %s45
      %s47 = ssub.s32 %s34, %s41
      %s48 = sor.u32 %s46, %s47
      %p49 = scmp.eq.s32.totalorder %s48, 0
      %s51 = sadd.s32 %s50, 1
      %s52 = scalar_select %p49, %s50, %s51
      %p55 = pneg %p49
      %p56 = scmp.eq.s32.totalorder %s26, 1
      %p57 = por %p55, %p56
      %p58 = scmp.ne.s32.totalorder %s50, %s53
      %p59 = scmp.eq.s32.totalorder %s26, 0
      %p60 = por %p58, %p59
      %p61 = scmp.ne.s32.totalorder %s50, %s53
      %p62 = scmp.eq.s32.totalorder %s31, 1
      %p63 = por %p61, %p62
      %p64 = scmp.ne.s32.totalorder %s53, %s54
      %p65 = scmp.eq.s32.totalorder %s31, 0
      %p66 = por %p64, %p65
      %p67 = scmp.ne.s32.totalorder %s53, %s54
      %p68 = scmp.eq.s32.totalorder %s32, 1
      %p69 = por %p67, %p68
      %p71 = scmp.ne.s32.totalorder %s54, %s70
      %p72 = scmp.eq.s32.totalorder %s32, 0
      %p73 = por %p71, %p72
      %s74 = ssub.s32 %s33, %s45
      %s75 = ssub.s32 %s34, %s41
      %s76 = sor.u32 %s74, %s75
      %p77 = scmp.eq.s32.totalorder %s76, 0
      %s79 = sadd.s32 %s78, 1
      %s80 = scalar_select %p77, %s78, %s79
      %p83 = pneg %p77
      %p84 = scmp.eq.s32.totalorder %s26, 1
      %p85 = por %p83, %p84
      %p86 = scmp.ne.s32.totalorder %s78, %s81
      %p87 = scmp.eq.s32.totalorder %s26, 0
      %p88 = por %p86, %p87
      %p89 = scmp.ne.s32.totalorder %s78, %s81
      %p90 = scmp.eq.s32.totalorder %s31, 1
      %p91 = por %p89, %p90
      %p92 = scmp.ne.s32.totalorder %s81, %s82
      %p93 = scmp.eq.s32.totalorder %s31, 0
      %p94 = por %p92, %p93
      %p95 = scmp.ne.s32.totalorder %s81, %s82
      %p96 = scmp.eq.s32.totalorder %s32, 1
      %p97 = por %p95, %p96
      %p99 = scmp.ne.s32.totalorder %s82, %s98
      %p100 = scmp.eq.s32.totalorder %s32, 0
      %p101 = por %p99, %p100
      %s102 = ssub.s32 %s33, %s45
      %s103 = ssub.s32 %s34, %s41
      %s104 = sor.u32 %s102, %s103
      %p105 = scmp.eq.s32.totalorder %s104, 0
      %s107 = sadd.s32 %s106, 1
      %s108 = scalar_select %p105, %s106, %s107
      %p111 = pneg %p105
      %p112 = scmp.eq.s32.totalorder %s26, 1
      %p113 = por %p111, %p112
      %p114 = scmp.ne.s32.totalorder %s106, %s109
      %p115 = scmp.eq.s32.totalorder %s26, 0
      %p116 = por %p114, %p115
      %p117 = scmp.ne.s32.totalorder %s106, %s109
      %p118 = scmp.eq.s32.totalorder %s31, 1
      %p119 = por %p117, %p118
      %p120 = scmp.ne.s32.totalorder %s109, %s110
      %p121 = scmp.eq.s32.totalorder %s31, 0
      %p122 = por %p120, %p121
      %p123 = scmp.ne.s32.totalorder %s109, %s110
      %p124 = scmp.eq.s32.totalorder %s32, 1
      %p125 = por %p123, %p124
      %p127 = scmp.ne.s32.totalorder %s110, %s126
      %p128 = scmp.eq.s32.totalorder %s32, 0
      %p129 = por %p127, %p128
      %s131 = sadd.s32 %s130, 1
      %p134 = scmp.eq.s32.totalorder %s26, 1
      %p135 = scmp.ne.s32.totalorder %s130, %s132
      %p136 = scmp.eq.s32.totalorder %s26, 0
      %p137 = por %p135, %p136
      %p138 = scmp.ne.s32.totalorder %s130, %s132
      %p139 = scmp.eq.s32.totalorder %s31, 1
      %p140 = por %p138, %p139
      %p141 = scmp.ne.s32.totalorder %s132, %s133
      %p142 = scmp.eq.s32.totalorder %s31, 0
      %p143 = por %p141, %p142
      %p144 = scmp.ne.s32.totalorder %s132, %s133
      %p145 = scmp.eq.s32.totalorder %s32, 1
      %p146 = por %p144, %p145
      %p148 = scmp.ne.s32.totalorder %s133, %s147
      %p149 = scmp.eq.s32.totalorder %s32, 0
      %p150 = por %p148, %p149
      %s152 = sadd.s32 %s151, 1
      %p155 = scmp.eq.s32.totalorder %s26, 1
      %p156 = scmp.ne.s32.totalorder %s151, %s153
      %p157 = scmp.eq.s32.totalorder %s26, 0
      %p158 = por %p156, %p157
      %p159 = scmp.ne.s32.totalorder %s151, %s153
      %p160 = scmp.eq.s32.totalorder %s31, 1
      %p161 = por %p159, %p160
      %p162 = scmp.ne.s32.totalorder %s153, %s154
      %p163 = scmp.eq.s32.totalorder %s31, 0
      %p164 = por %p162, %p163
      %p165 = scmp.ne.s32.totalorder %s153, %s154
      %p166 = scmp.eq.s32.totalorder %s32, 1
      %p167 = por %p165, %p166
      %p169 = scmp.ne.s32.totalorder %s154, %s168
      %p170 = scmp.eq.s32.totalorder %s32, 0
      %p171 = por %p169, %p170
      %s172 = ssub.s32 %s33, %s45
      %p173 = scmp.eq.s32.totalorder %s172, 0
      %s175 = sadd.s32 %s174, 1
      %s176 = scalar_select %p173, %s174, %s175
      %p179 = pneg %p173
      %p180 = scmp.eq.s32.totalorder %s26, 1
      %p181 = por %p179, %p180
      %p182 = scmp.ne.s32.totalorder %s174, %s177
      %p183 = scmp.eq.s32.totalorder %s26, 0
      %p184 = por %p182, %p183
      %p185 = scmp.ne.s32.totalorder %s174, %s177
      %p186 = scmp.eq.s32.totalorder %s31, 1
      %p187 = por %p185, %p186
      %p188 = scmp.ne.s32.totalorder %s177, %s178
      %p189 = scmp.eq.s32.totalorder %s31, 0
      %p190 = por %p188, %p189
      %p191 = scmp.ne.s32.totalorder %s177, %s178
      %p192 = scmp.eq.s32.totalorder %s32, 1
      %p193 = por %p191, %p192
      %p195 = scmp.ne.s32.totalorder %s178, %s194
      %p196 = scmp.eq.s32.totalorder %s32, 0
      %p197 = por %p195, %p196
      %s198 = ssub.s32 %s33, %s45
      %p199 = scmp.eq.s32.totalorder %s198, 0
      %s201 = sadd.s32 %s200, 1
      %s202 = scalar_select %p199, %s200, %s201
      %p205 = pneg %p199
      %p206 = scmp.eq.s32.totalorder %s26, 1
      %p207 = por %p205, %p206
      %p208 = scmp.ne.s32.totalorder %s200, %s203
      %p209 = scmp.eq.s32.totalorder %s26, 0
      %p210 = por %p208, %p209
      %p211 = scmp.ne.s32.totalorder %s200, %s203
      %p212 = scmp.eq.s32.totalorder %s31, 1
      %p213 = por %p211, %p212
      %p214 = scmp.ne.s32.totalorder %s203, %s204
      %p215 = scmp.eq.s32.totalorder %s31, 0
      %p216 = por %p214, %p215
      %p217 = scmp.ne.s32.totalorder %s203, %s204
      %p218 = scmp.eq.s32.totalorder %s32, 1
      %p219 = por %p217, %p218
      %p221 = scmp.ne.s32.totalorder %s204, %s220
      %p222 = scmp.eq.s32.totalorder %s32, 0
      %p223 = por %p221, %p222
      %p224 = scmp.le.s32.totalorder 1, %s26
      %p225 = scmp.lt.s32.totalorder %s26, 3
      %p226 = pnand %p224, %p225
      %p227 = pneg %p226
      // Predicated region
      $region9: #{tpu_custom_call.1} parent=5 // pred_check
        _
      $region10: #{tpu_custom_call.1} parent=5 // pred_check_branch
        %229 = sbr.rel (%p226) target = $region12
      $region11: #{tpu_custom_call.1} parent=5 // pred_region
        %s230 = ssub.s32 %s26, 1
        // Predicated region
        $region13: #{tpu_custom_call.1} parent=11 // pred_check
          %p231 = pneg %p143
        $region14: #{tpu_custom_call.1} parent=11 // pred_check_branch
          %233 = sbr.rel (%p231) target = $region16
        $region15: #{tpu_custom_call.1} parent=11 // pred_region
          %235 = vsyncadd [#allocation11], 0
          %s236 = sshll.u32 %s3, 4
          %s237 = int_to_ptr.hbm [resolvable:$true] %s236
          %s238 = sshll.u32 [#allocation10], 4
          %s239 = int_to_ptr.vmem [resolvable:$true] %s238
          %244 = dma.hbm_to_vmem [thread:$0]  %s237, 2048, %s239, [#allocation11], 128, 128, 8
        $region16: #{tpu_custom_call.1} parent=11 // pred_fallthru
          _
        // Predicated region
        $region17: #{tpu_custom_call.1} parent=11 // pred_check
          %p245 = pneg %p164
        $region18: #{tpu_custom_call.1} parent=11 // pred_check_branch
          %247 = sbr.rel (%p245) target = $region20
        $region19: #{tpu_custom_call.1} parent=11 // pred_region
          %249 = vsyncadd [#allocation11], 0
          %s250 = sshll.u32 %s4, 4
          %s251 = int_to_ptr.hbm [resolvable:$true] %s250
          %s252 = sshll.u32 [#allocation12], 4
          %s253 = int_to_ptr.vmem [resolvable:$true] %s252
          %258 = dma.hbm_to_vmem [thread:$0]  %s251, 2048, %s253, [#allocation11], 128, 128, 8
        $region20: #{tpu_custom_call.1} parent=11 // pred_fallthru
          _
      $region12: #{tpu_custom_call.1} parent=5 // pred_fallthru
        _
      %p259 = scmp.lt.s32.totalorder %s26, 2
      // Predicated region
      $region21: #{tpu_custom_call.1} parent=5 // pred_check
        %p260 = pneg %p259
      $region22: #{tpu_custom_call.1} parent=5 // pred_check_branch
        %262 = sbr.rel (%p260) target = $region24
      $region23: #{tpu_custom_call.1} parent=5 // pred_region
        // Predicated region
        $region25: #{tpu_custom_call.1} parent=23 // pred_check
          %p263 = pneg %p60
        $region26: #{tpu_custom_call.1} parent=23 // pred_check_branch
          %265 = sbr.rel (%p263) target = $region28
        $region27: #{tpu_custom_call.1} parent=23 // pred_region
          %s266 = sand.u32 %s50, 1
          %s267 = scalar_lea.sflag [#allocation5], %s266
          %s268 = sand.u32 %s50, 1
          %s269 = smul.addr %s268, 32
          %s270 = scalar_lea.vmem [#allocation4], %s269
          %s271 = smul.u32 4, %s34
          %273 = vsyncadd %s267, 0
          %s274 = smul.addr %s33, 4
          %s275 = sadd.s32 %s271, %s274
          %s276 = smul.addr %s275, 8
          %s277 = scalar_lea.hbm %s0, %s276
          %s278 = sshll.u32 %s277, 4
          %s279 = int_to_ptr.hbm [resolvable:$true] %s278
          %s280 = sshll.u32 %s270, 4
          %s281 = int_to_ptr.vmem [resolvable:$true] %s280
          %286 = dma.hbm_to_vmem [thread:$0]  %s279, 512, %s281, %s267, 128, 128, 8
        $region28: #{tpu_custom_call.1} parent=23 // pred_fallthru
          _
        // Predicated region
        $region29: #{tpu_custom_call.1} parent=23 // pred_check
          %p287 = pneg %p88
        $region30: #{tpu_custom_call.1} parent=23 // pred_check_branch
          %289 = sbr.rel (%p287) target = $region32
        $region31: #{tpu_custom_call.1} parent=23 // pred_region
          %s290 = sand.u32 %s26, 1
          %s291 = scalar_lea.sflag [#allocation8], %s290
          %s292 = sand.u32 %s78, 1
          %s293 = smul.addr %s292, 32
          %s294 = scalar_lea.vmem [#allocation7], %s293
          %s295 = smul.u32 4, %s34
          %297 = vsyncadd %s291, 0
          %s298 = smul.addr %s33, 4
          %s299 = sadd.s32 %s295, %s298
          %s300 = smul.addr %s299, 8
          %s301 = scalar_lea.hbm %s1, %s300
          %s302 = sshll.u32 %s301, 4
          %s303 = int_to_ptr.hbm [resolvable:$true] %s302
          %s304 = sshll.u32 %s294, 4
          %s305 = int_to_ptr.vmem [resolvable:$true] %s304
          %310 = dma.hbm_to_vmem [thread:$0]  %s303, 512, %s305, %s291, 128, 128, 8
        $region32: #{tpu_custom_call.1} parent=23 // pred_fallthru
          _
        // Predicated region
        $region33: #{tpu_custom_call.1} parent=23 // pred_check
          %p311 = pneg %p116
        $region34: #{tpu_custom_call.1} parent=23 // pred_check_branch
          %313 = sbr.rel (%p311) target = $region36
        $region35: #{tpu_custom_call.1} parent=23 // pred_region
          %s314 = sand.u32 %s26, 1
          %s315 = scalar_lea.sflag [#allocation8], %s314
          %s316 = sand.u32 %s106, 1
          %s317 = smul.addr %s316, 32
          %s318 = scalar_lea.vmem [#allocation9], %s317
          %s319 = smul.u32 4, %s34
          %321 = vsyncadd %s315, 0
          %s322 = smul.addr %s33, 4
          %s323 = sadd.s32 %s319, %s322
          %s324 = smul.addr %s323, 8
          %s325 = scalar_lea.hbm %s2, %s324
          %s326 = sshll.u32 %s325, 4
          %s327 = int_to_ptr.hbm [resolvable:$true] %s326
          %s328 = sshll.u32 %s318, 4
          %s329 = int_to_ptr.vmem [resolvable:$true] %s328
          %334 = dma.hbm_to_vmem [thread:$0]  %s327, 512, %s329, %s315, 128, 128, 8
        $region36: #{tpu_custom_call.1} parent=23 // pred_fallthru
          _
      $region24: #{tpu_custom_call.1} parent=5 // pred_fallthru
        _
      %p335 = scmp.le.s32.totalorder 1, %s26
      %p336 = scmp.lt.s32.totalorder %s26, 3
      %p337 = pnand %p335, %p336
      %p338 = pneg %p337
      // Predicated region
      $region37: #{tpu_custom_call.1} parent=5 // pred_check
        _
      $region38: #{tpu_custom_call.1} parent=5 // pred_check_branch
        %340 = sbr.rel (%p337) target = $region40
      $region39: #{tpu_custom_call.1} parent=5 // pred_region
        %s341 = ssub.s32 %s26, 1
        %s342 = sand.u32 %s53, 1
        %s343 = scalar_lea.sflag [#allocation5], %s342
        %s344 = sand.u32 %s53, 1
        %s345 = smul.addr %s344, 32
        %s346 = scalar_lea.vmem [#allocation4], %s345
        // Predicated region
        $region41: #{tpu_custom_call.1} parent=39 // pred_check
          %p347 = pneg %p66
        $region42: #{tpu_custom_call.1} parent=39 // pred_check_branch
          %349 = sbr.rel (%p347) target = $region44
        $region43: #{tpu_custom_call.1} parent=39 // pred_region
          %351 = dma.done %s343, 512
        $region44: #{tpu_custom_call.1} parent=39 // pred_fallthru
          _
        %s352 = sand.u32 %s31, 1
        %s353 = scalar_lea.sflag [#allocation8], %s352
        %s354 = sand.u32 %s81, 1
        %s355 = smul.addr %s354, 32
        %s356 = scalar_lea.vmem [#allocation7], %s355
        // Predicated region
        $region45: #{tpu_custom_call.1} parent=39 // pred_check
          %p357 = pneg %p94
        $region46: #{tpu_custom_call.1} parent=39 // pred_check_branch
          %359 = sbr.rel (%p357) target = $region48
        $region47: #{tpu_custom_call.1} parent=39 // pred_region
          %361 = dma.done %s353, 512
        $region48: #{tpu_custom_call.1} parent=39 // pred_fallthru
          _
        %s362 = sand.u32 %s31, 1
        %s363 = scalar_lea.sflag [#allocation8], %s362
        %s364 = sand.u32 %s109, 1
        %s365 = smul.addr %s364, 32
        %s366 = scalar_lea.vmem [#allocation9], %s365
        // Predicated region
        $region49: #{tpu_custom_call.1} parent=39 // pred_check
          %p367 = pneg %p122
        $region50: #{tpu_custom_call.1} parent=39 // pred_check_branch
          %369 = sbr.rel (%p367) target = $region52
        $region51: #{tpu_custom_call.1} parent=39 // pred_region
          %371 = dma.done %s363, 512
        $region52: #{tpu_custom_call.1} parent=39 // pred_fallthru
          _
        // Predicated region
        $region53: #{tpu_custom_call.1} parent=39 // pred_check
          %p372 = pneg %p143
        $region54: #{tpu_custom_call.1} parent=39 // pred_check_branch
          %374 = sbr.rel (%p372) target = $region56
        $region55: #{tpu_custom_call.1} parent=39 // pred_region
          %376 = dma.done [#allocation11], 2048
        $region56: #{tpu_custom_call.1} parent=39 // pred_fallthru
          _
        // Predicated region
        $region57: #{tpu_custom_call.1} parent=39 // pred_check
          %p377 = pneg %p164
        $region58: #{tpu_custom_call.1} parent=39 // pred_check_branch
          %379 = sbr.rel (%p377) target = $region60
        $region59: #{tpu_custom_call.1} parent=39 // pred_region
          %381 = dma.done [#allocation11], 2048
        $region60: #{tpu_custom_call.1} parent=39 // pred_fallthru
          _
        %s382 = sand.u32 %s53, 1
        %s383 = scalar_lea.sflag [#allocation5], %s382
        %s384 = sand.u32 %s53, 1
        %s385 = smul.addr %s384, 32
        %s386 = scalar_lea.vmem [#allocation4], %s385
        %p387 = pneg %p66
        %p388 = pneg %p63
        %s389 = sand.u32 %s31, 1
        %s390 = scalar_lea.sflag [#allocation8], %s389
        %s391 = sand.u32 %s81, 1
        %s392 = smul.addr %s391, 32
        %s393 = scalar_lea.vmem [#allocation7], %s392
        %p394 = pneg %p94
        %p395 = pneg %p91
        %s396 = sand.u32 %s31, 1
        %s397 = scalar_lea.sflag [#allocation8], %s396
        %s398 = sand.u32 %s109, 1
        %s399 = smul.addr %s398, 32
        %s400 = scalar_lea.vmem [#allocation9], %s399
        %p401 = pneg %p122
        %p402 = pneg %p119
        %p403 = pneg %p143
        %p404 = pneg %p140
        %p405 = pneg %p164
        %p406 = pneg %p161
        %p407 = pneg %p190
        %p408 = pneg %p187
        %s409 = sand.u32 %s177, 1
        %s410 = scalar_lea.sflag [#allocation6], %s409
        %s411 = sand.u32 %s177, 1
        %s412 = smul.addr %s411, 128
        %s413 = scalar_lea.vmem [#allocation13], %s412
        %p414 = pneg %p216
        %p415 = pneg %p213
        %s416 = sand.u32 %s203, 1
        %s417 = scalar_lea.sflag [#allocation15], %s416
        %s418 = sand.u32 %s203, 1
        %s419 = scalar_lea.vmem [#allocation14], %s418
        %s420 = smul.u32 4, %s36
        %s421 = smul.u32 4, %s36
        %s422 = smul.u32 4, %s36
        %p424 = scmp.eq.s32.totalorder %s36, 0
        // Predicated region
        $region61: #{tpu_custom_call.1} parent=39 // pred_check
          %p425 = pneg %p424
        $region62: #{tpu_custom_call.1} parent=39 // pred_check_branch
          %427 = sbr.rel (%p425) target = $region64
        $region63: #{tpu_custom_call.1} parent=39 // pred_region
          %428 = vst [vmem:[#allocation2] sm:$0xff] 0.0
          %429 = vst [vmem:[#allocation2 + $0x8] sm:$0xff] 0.0
          %430 = vst [vmem:[#allocation2 + $0x10] sm:$0xff] 0.0
          %431 = vst [vmem:[#allocation2 + $0x18] sm:$0xff] 0.0
          %432 = vst [vmem:[#allocation2 + $0x20] sm:$0xff] 0.0
          %433 = vst [vmem:[#allocation2 + $0x28] sm:$0xff] 0.0
          %434 = vst [vmem:[#allocation2 + $0x30] sm:$0xff] 0.0
          %435 = vst [vmem:[#allocation2 + $0x38] sm:$0xff] 0.0
          %436 = vst [vmem:[#allocation2 + $0x40] sm:$0xff] 0.0
          %437 = vst [vmem:[#allocation2 + $0x48] sm:$0xff] 0.0
          %438 = vst [vmem:[#allocation2 + $0x50] sm:$0xff] 0.0
          %439 = vst [vmem:[#allocation2 + $0x58] sm:$0xff] 0.0
          %440 = vst [vmem:[#allocation2 + $0x60] sm:$0xff] 0.0
          %441 = vst [vmem:[#allocation2 + $0x68] sm:$0xff] 0.0
          %442 = vst [vmem:[#allocation2 + $0x70] sm:$0xff] 0.0
          %443 = vst [vmem:[#allocation2 + $0x78] sm:$0xff] 0.0
          %444 = vst [vmem:[#allocation3] sm:$0x1] 0.0
        $region64: #{tpu_custom_call.1} parent=39 // pred_fallthru
          _
        %v445 = vld [vmem:[%s346] sm:$0xff]
        %v446 = vld [vmem:[%s346 + $0x8] sm:$0xff]
        %v447 = vld [vmem:[%s346 + $0x10] sm:$0xff]
        %v448 = vld [vmem:[%s346 + $0x18] sm:$0xff]
        %v449 = vpack.c.bf16 %v446, %v445
        %v450 = vpack.c.bf16 %v448, %v447
        %v451 = vld [vmem:[#allocation10] sm:$0xff]
        %v452 = vld [vmem:[#allocation10 + $0x8] sm:$0xff]
        %v453 = vld [vmem:[#allocation10 + $0x10] sm:$0xff]
        %v454 = vld [vmem:[#allocation10 + $0x18] sm:$0xff]
        %v455 = vld [vmem:[#allocation10 + $0x20] sm:$0xff]
        %v456 = vld [vmem:[#allocation10 + $0x28] sm:$0xff]
        %v457 = vld [vmem:[#allocation10 + $0x30] sm:$0xff]
        %v458 = vld [vmem:[#allocation10 + $0x38] sm:$0xff]
        %v459 = vld [vmem:[#allocation10 + $0x40] sm:$0xff]
        %v460 = vld [vmem:[#allocation10 + $0x48] sm:$0xff]
        %v461 = vld [vmem:[#allocation10 + $0x50] sm:$0xff]
        %v462 = vld [vmem:[#allocation10 + $0x58] sm:$0xff]
        %v463 = vld [vmem:[#allocation10 + $0x60] sm:$0xff]
        %v464 = vld [vmem:[#allocation10 + $0x68] sm:$0xff]
        %v465 = vld [vmem:[#allocation10 + $0x70] sm:$0xff]
        %v466 = vld [vmem:[#allocation10 + $0x78] sm:$0xff]
        %v483 = vunpack.c.l.b16 %v451
        %v484 = vunpack.c.h.b16 %v451
        %v485 = vunpack.c.l.b16 %v452
        %v486 = vunpack.c.h.b16 %v452
        %v487 = vunpack.c.l.b16 %v453
        %v488 = vunpack.c.h.b16 %v453
        %v489 = vunpack.c.l.b16 %v454
        %v490 = vunpack.c.h.b16 %v454
        %v491 = vunpack.c.l.b16 %v455
        %v492 = vunpack.c.h.b16 %v455
        %v493 = vunpack.c.l.b16 %v456
        %v494 = vunpack.c.h.b16 %v456
        %v495 = vunpack.c.l.b16 %v457
        %v496 = vunpack.c.h.b16 %v457
        %v497 = vunpack.c.l.b16 %v458
        %v498 = vunpack.c.h.b16 %v458
        %v499 = vunpack.c.l.b16 %v459
        %v500 = vunpack.c.h.b16 %v459
        %v501 = vunpack.c.l.b16 %v460
        %v502 = vunpack.c.h.b16 %v460
        %v503 = vunpack.c.l.b16 %v461
        %v504 = vunpack.c.h.b16 %v461
        %v505 = vunpack.c.l.b16 %v462
        %v506 = vunpack.c.h.b16 %v462
        %v507 = vunpack.c.l.b16 %v463
        %v508 = vunpack.c.h.b16 %v463
        %v509 = vunpack.c.l.b16 %v464
        %v510 = vunpack.c.h.b16 %v464
        %v511 = vunpack.c.l.b16 %v465
        %v512 = vunpack.c.h.b16 %v465
        %v513 = vunpack.c.l.b16 %v466
        %v514 = vunpack.c.h.b16 %v466
        %v515 = vpack.c.b16 %v485, %v483
        %v516 = vpack.c.b16 %v486, %v484
        %v517 = vpack.c.b16 %v489, %v487
        %v518 = vpack.c.b16 %v490, %v488
        %v519 = vpack.c.b16 %v493, %v491
        %v520 = vpack.c.b16 %v494, %v492
        %v521 = vpack.c.b16 %v497, %v495
        %v522 = vpack.c.b16 %v498, %v496
        %v523 = vpack.c.b16 %v501, %v499
        %v524 = vpack.c.b16 %v502, %v500
        %v525 = vpack.c.b16 %v505, %v503
        %v526 = vpack.c.b16 %v506, %v504
        %v527 = vpack.c.b16 %v509, %v507
        %v528 = vpack.c.b16 %v510, %v508
        %v529 = vpack.c.b16 %v513, %v511
        %v530 = vpack.c.b16 %v514, %v512
        %547 = vmatpush.bf16.msra.mxu0 %v529
        %548 = vmatpush.bf16.msra.mxu0 %v527
        %549 = vmatpush.bf16.msra.mxu0 %v525
        %550 = vmatpush.bf16.msra.mxu0 %v523
        %551 = vmatpush.bf16.msra.mxu0 %v521
        %552 = vmatpush.bf16.msra.mxu0 %v519
        %553 = vmatpush.bf16.msra.mxu0 %v517
        %554 = vmatpush.bf16.msra.mxu0 %v515
        %555 = vmatmul.bf16.gmra.mxu0 %v449
        %v556 = vpop.f32.mrf.mxu0
        %v557 = vadd.f32 0.0, %v556
        %v558 = vpop.f32.mrf.mxu0
        %v559 = vadd.f32 0.0, %v558
        %560 = vmatmul.bf16.gmra.mxu0 %v450
        %v561 = vpop.f32.mrf.mxu0
        %v562 = vadd.f32 0.0, %v561
        %v563 = vpop.f32.mrf.mxu0
        %v564 = vadd.f32 0.0, %v563
        %565 = vdwg.mxu0
        %566 = vmatpush.bf16.msra.mxu0 %v530
        %567 = vmatpush.bf16.msra.mxu0 %v528
        %568 = vmatpush.bf16.msra.mxu0 %v526
        %569 = vmatpush.bf16.msra.mxu0 %v524
        %570 = vmatpush.bf16.msra.mxu0 %v522
        %571 = vmatpush.bf16.msra.mxu0 %v520
        %572 = vmatpush.bf16.msra.mxu0 %v518
        %573 = vmatpush.bf16.msra.mxu0 %v516
        %574 = vmatmul.bf16.gmra.mxu0 %v449
        %v575 = vpop.f32.mrf.mxu0
        %v576 = vadd.f32 0.0, %v575
        %v577 = vpop.f32.mrf.mxu0
        %v578 = vadd.f32 0.0, %v577
        %579 = vmatmul.bf16.gmra.mxu0 %v450
        %v580 = vpop.f32.mrf.mxu0
        %v581 = vadd.f32 0.0, %v580
        %v582 = vpop.f32.mrf.mxu0
        %v583 = vadd.f32 0.0, %v582
        %584 = vdwg.mxu0
        %v585 = vsub.f32 0.0, %v557
        %v586 = vsub.f32 0.0, %v559
        %v587 = vsub.f32 0.0, %v562
        %v588 = vsub.f32 0.0, %v564
        %593 = vrot.lane.b32.xlu0 %v585, 64
        %v594 = vpop.permute.xlu0 %593
        %595 = vrot.lane.b32.xlu0 %v586, 64
        %v596 = vpop.permute.xlu0 %595
        %597 = vrot.lane.b32.xlu0 %v587, 64
        %v598 = vpop.permute.xlu0 %597
        %599 = vrot.lane.b32.xlu0 %v588, 64
        %v600 = vpop.permute.xlu0 %599
        %609 = vrot.lane.b32.xlu0 %v557, 64
        %v610 = vpop.permute.xlu0 %609
        %611 = vrot.lane.b32.xlu0 %v559, 64
        %v612 = vpop.permute.xlu0 %611
        %613 = vrot.lane.b32.xlu0 %v562, 64
        %v614 = vpop.permute.xlu0 %613
        %615 = vrot.lane.b32.xlu0 %v564, 64
        %v616 = vpop.permute.xlu0 %615
        %vm621 = vcmask 523264
        %v622 = vsel %vm621, %v594, %v610
        %v623 = vsel %vm621, %v596, %v612
        %v624 = vsel %vm621, %v598, %v614
        %v625 = vsel %vm621, %v600, %v616
        %v626 = vld [vmem:[%s356] sm:$0xff]
        %v627 = vld [vmem:[%s356 + $0x8] sm:$0xff]
        %v628 = vld [vmem:[%s356 + $0x10] sm:$0xff]
        %v629 = vld [vmem:[%s356 + $0x18] sm:$0xff]
        %v630 = vmul.f32 %v557, %v626
        %v631 = vmul.f32 %v559, %v627
        %v632 = vmul.f32 %v562, %v628
        %v633 = vmul.f32 %v564, %v629
        %v634 = vld [vmem:[%s366] sm:$0xff]
        %v635 = vld [vmem:[%s366 + $0x8] sm:$0xff]
        %v636 = vld [vmem:[%s366 + $0x10] sm:$0xff]
        %v637 = vld [vmem:[%s366 + $0x18] sm:$0xff]
        %v638 = vmul.f32 %v622, %v634
        %v639 = vmul.f32 %v623, %v635
        %v640 = vmul.f32 %v624, %v636
        %v641 = vmul.f32 %v625, %v637
        %v642 = vadd.f32 %v630, %v638
        %v643 = vadd.f32 %v631, %v639
        %v644 = vadd.f32 %v632, %v640
        %v645 = vadd.f32 %v633, %v641
        %vm646 = vcmp.gt.f32.partialorder %v642, 0.0
        %vm647 = vcmp.gt.f32.partialorder %v643, 0.0
        %vm648 = vcmp.gt.f32.partialorder %v644, 0.0
        %vm649 = vcmp.gt.f32.partialorder %v645, 0.0
        %v650 = vadd.f32 %v642, 1.0
        %v651 = vadd.f32 %v643, 1.0
        %v652 = vadd.f32 %v644, 1.0
        %v653 = vadd.f32 %v645, 1.0
        %v654 = vmul.f32 %v642, 1.442695
        %v655 = vpow.pop %v654
        %v656 = vmul.f32 %v643, 1.442695
        %v657 = vpow.pop %v656
        %v658 = vmul.f32 %v644, 1.442695
        %v659 = vpow.pop %v658
        %v660 = vmul.f32 %v645, 1.442695
        %v661 = vpow.pop %v660
        %v662 = vsel %vm646, %v650, %v655
        %v663 = vsel %vm647, %v651, %v657
        %v664 = vsel %vm648, %v652, %v659
        %v665 = vsel %vm649, %v653, %v661
        %v666 = vld [vmem:[#allocation2] sm:$0xff]
        %v667 = vld [vmem:[#allocation2 + $0x8] sm:$0xff]
        %v668 = vld [vmem:[#allocation2 + $0x10] sm:$0xff]
        %v669 = vld [vmem:[#allocation2 + $0x18] sm:$0xff]
        %v670 = vld [vmem:[#allocation2 + $0x20] sm:$0xff]
        %v671 = vld [vmem:[#allocation2 + $0x28] sm:$0xff]
        %v672 = vld [vmem:[#allocation2 + $0x30] sm:$0xff]
        %v673 = vld [vmem:[#allocation2 + $0x38] sm:$0xff]
        %v674 = vld [vmem:[#allocation2 + $0x40] sm:$0xff]
        %v675 = vld [vmem:[#allocation2 + $0x48] sm:$0xff]
        %v676 = vld [vmem:[#allocation2 + $0x50] sm:$0xff]
        %v677 = vld [vmem:[#allocation2 + $0x58] sm:$0xff]
        %v678 = vld [vmem:[#allocation2 + $0x60] sm:$0xff]
        %v679 = vld [vmem:[#allocation2 + $0x68] sm:$0xff]
        %v680 = vld [vmem:[#allocation2 + $0x70] sm:$0xff]
        %v681 = vld [vmem:[#allocation2 + $0x78] sm:$0xff]
        %682 = vxpose.xlu0.b32.start [1/16] %v662, 128
        %683 = vxpose.xlu0.b32.cont [2/16] %v663, 128
        %684 = vxpose.xlu0.b32.cont [3/16] %v664, 128
        %685 = vxpose.xlu0.b32.cont [4/16] %v665, 128
        %686 = vxpose.xlu0.b32.cont [5/16] 0.0, 128
        %687 = vxpose.xlu0.b32.cont [6/16] 0.0, 128
        %688 = vxpose.xlu0.b32.cont [7/16] 0.0, 128
        %689 = vxpose.xlu0.b32.cont [8/16] 0.0, 128
        %690 = vxpose.xlu0.b32.cont [9/16] 0.0, 128
        %691 = vxpose.xlu0.b32.cont [10/16] 0.0, 128
        %692 = vxpose.xlu0.b32.cont [11/16] 0.0, 128
        %693 = vxpose.xlu0.b32.cont [12/16] 0.0, 128
        %694 = vxpose.xlu0.b32.cont [13/16] 0.0, 128
        %695 = vxpose.xlu0.b32.cont [14/16] 0.0, 128
        %696 = vxpose.xlu0.b32.cont [15/16] 0.0, 128
        %697 = vxpose.xlu0.b32.end [16/16] 0.0, 128
        %v698 = vpop.trf.xlu0
        %v699 = vpop.trf.xlu0
        %v700 = vpop.trf.xlu0
        %v701 = vpop.trf.xlu0
        %v702 = vpop.trf.xlu0
        %v703 = vpop.trf.xlu0
        %v704 = vpop.trf.xlu0
        %v705 = vpop.trf.xlu0
        %v706 = vpop.trf.xlu0
        %v707 = vpop.trf.xlu0
        %v708 = vpop.trf.xlu0
        %v709 = vpop.trf.xlu0
        %v710 = vpop.trf.xlu0
        %v711 = vpop.trf.xlu0
        %v712 = vpop.trf.xlu0
        %v713 = vpop.trf.xlu0
        %v714 = vpack.c.bf16 %v699, %v698
        %v715 = vpack.c.bf16 %v701, %v700
        %v716 = vpack.c.bf16 %v703, %v702
        %v717 = vpack.c.bf16 %v705, %v704
        %v718 = vpack.c.bf16 %v707, %v706
        %v719 = vpack.c.bf16 %v709, %v708
        %v720 = vpack.c.bf16 %v711, %v710
        %v721 = vpack.c.bf16 %v713, %v712
        %v722 = vpack.c.bf16 %v578, %v576
        %v723 = vpack.c.bf16 %v583, %v581
        %vm724 = vcmask 261120
        %v726 = vsel %vm724, %v714, 0
        %v729 = vsel %vm724, %v715, 0
        %v732 = vsel %vm724, %v716, 0
        %v735 = vsel %vm724, %v717, 0
        %v738 = vsel %vm724, %v718, 0
        %v741 = vsel %vm724, %v719, 0
        %v744 = vsel %vm724, %v720, 0
        %v747 = vsel %vm724, %v721, 0
        %749 = vmatpush.bf16.msra.mxu0 0
        %750 = vmatpush.bf16.msra.mxu0 0
        %751 = vmatpush.bf16.msra.mxu0 0
        %752 = vmatpush.bf16.msra.mxu0 0
        %753 = vmatpush.bf16.msra.mxu0 0
        %754 = vmatpush.bf16.msra.mxu0 0
        %755 = vmatpush.bf16.msra.mxu0 %v723
        %756 = vmatpush.bf16.msra.mxu0 %v722
        %757 = vmatmul.bf16.gmra.mxu0 %v726
        %v758 = vpop.f32.mrf.mxu0
        %v759 = vadd.f32 0.0, %v758
        %v760 = vpop.f32.mrf.mxu0
        %v761 = vadd.f32 0.0, %v760
        %762 = vmatmul.bf16.gmra.mxu0 %v729
        %v763 = vpop.f32.mrf.mxu0
        %v764 = vadd.f32 0.0, %v763
        %v765 = vpop.f32.mrf.mxu0
        %v766 = vadd.f32 0.0, %v765
        %767 = vmatmul.bf16.gmra.mxu0 %v732
        %v768 = vpop.f32.mrf.mxu0
        %v769 = vadd.f32 0.0, %v768
        %v770 = vpop.f32.mrf.mxu0
        %v771 = vadd.f32 0.0, %v770
        %772 = vmatmul.bf16.gmra.mxu0 %v735
        %v773 = vpop.f32.mrf.mxu0
        %v774 = vadd.f32 0.0, %v773
        %v775 = vpop.f32.mrf.mxu0
        %v776 = vadd.f32 0.0, %v775
        %777 = vmatmul.bf16.gmra.mxu0 %v738
        %v778 = vpop.f32.mrf.mxu0
        %v779 = vadd.f32 0.0, %v778
        %v780 = vpop.f32.mrf.mxu0
        %v781 = vadd.f32 0.0, %v780
        %782 = vmatmul.bf16.gmra.mxu0 %v741
        %v783 = vpop.f32.mrf.mxu0
        %v784 = vadd.f32 0.0, %v783
        %v785 = vpop.f32.mrf.mxu0
        %v786 = vadd.f32 0.0, %v785
        %787 = vmatmul.bf16.gmra.mxu0 %v744
        %v788 = vpop.f32.mrf.mxu0
        %v789 = vadd.f32 0.0, %v788
        %v790 = vpop.f32.mrf.mxu0
        %v791 = vadd.f32 0.0, %v790
        %792 = vmatmul.bf16.gmra.mxu0 %v747
        %v793 = vpop.f32.mrf.mxu0
        %v794 = vadd.f32 0.0, %v793
        %v795 = vpop.f32.mrf.mxu0
        %v796 = vadd.f32 0.0, %v795
        %797 = vdwg.mxu0
        %v798 = vadd.f32 %v666, %v759
        %v799 = vadd.f32 %v667, %v761
        %v800 = vadd.f32 %v668, %v764
        %v801 = vadd.f32 %v669, %v766
        %v802 = vadd.f32 %v670, %v769
        %v803 = vadd.f32 %v671, %v771
        %v804 = vadd.f32 %v672, %v774
        %v805 = vadd.f32 %v673, %v776
        %v806 = vadd.f32 %v674, %v779
        %v807 = vadd.f32 %v675, %v781
        %v808 = vadd.f32 %v676, %v784
        %v809 = vadd.f32 %v677, %v786
        %v810 = vadd.f32 %v678, %v789
        %v811 = vadd.f32 %v679, %v791
        %v812 = vadd.f32 %v680, %v794
        %v813 = vadd.f32 %v681, %v796
        %814 = vst [vmem:[#allocation2] sm:$0xff] %v798
        %815 = vst [vmem:[#allocation2 + $0x8] sm:$0xff] %v799
        %816 = vst [vmem:[#allocation2 + $0x10] sm:$0xff] %v800
        %817 = vst [vmem:[#allocation2 + $0x18] sm:$0xff] %v801
        %818 = vst [vmem:[#allocation2 + $0x20] sm:$0xff] %v802
        %819 = vst [vmem:[#allocation2 + $0x28] sm:$0xff] %v803
        %820 = vst [vmem:[#allocation2 + $0x30] sm:$0xff] %v804
        %821 = vst [vmem:[#allocation2 + $0x38] sm:$0xff] %v805
        %822 = vst [vmem:[#allocation2 + $0x40] sm:$0xff] %v806
        %823 = vst [vmem:[#allocation2 + $0x48] sm:$0xff] %v807
        %824 = vst [vmem:[#allocation2 + $0x50] sm:$0xff] %v808
        %825 = vst [vmem:[#allocation2 + $0x58] sm:$0xff] %v809
        %826 = vst [vmem:[#allocation2 + $0x60] sm:$0xff] %v810
        %827 = vst [vmem:[#allocation2 + $0x68] sm:$0xff] %v811
        %828 = vst [vmem:[#allocation2 + $0x70] sm:$0xff] %v812
        %829 = vst [vmem:[#allocation2 + $0x78] sm:$0xff] %v813
        %v830 = vld [vmem:[#allocation3] sm:$0x1]
        %v831 = vadd.f32 %v662, %v663
        %v832 = vadd.f32 %v831, %v664
        %v833 = vadd.f32 %v832, %v665
        %v834 = vrot.slane %v833, 4
        %v835 = vadd.f32 %v833, %v834
        %v836 = vrot.slane %v835, 2
        %v837 = vadd.f32 %v835, %v836
        %v838 = vrot.slane %v837, 1
        %v839 = vadd.f32 %v837, %v838
        %v840 = vadd.f32 %v830, %v839
        %841 = vst [vmem:[#allocation3] sm:$0x1] %v840
        // Predicated region
        $region65: #{tpu_custom_call.1} parent=39 // pred_check
          %p842 = pneg %p424
        $region66: #{tpu_custom_call.1} parent=39 // pred_check_branch
          %844 = sbr.rel (%p842) target = $region68
        $region67: #{tpu_custom_call.1} parent=39 // pred_region
          %v845 = vld [vmem:[#allocation2] sm:$0xff]
          %v846 = vld [vmem:[#allocation2 + $0x8] sm:$0xff]
          %v847 = vld [vmem:[#allocation2 + $0x10] sm:$0xff]
          %v848 = vld [vmem:[#allocation2 + $0x18] sm:$0xff]
          %v849 = vld [vmem:[#allocation2 + $0x20] sm:$0xff]
          %v850 = vld [vmem:[#allocation2 + $0x28] sm:$0xff]
          %v851 = vld [vmem:[#allocation2 + $0x30] sm:$0xff]
          %v852 = vld [vmem:[#allocation2 + $0x38] sm:$0xff]
          %v853 = vld [vmem:[#allocation2 + $0x40] sm:$0xff]
          %v854 = vld [vmem:[#allocation2 + $0x48] sm:$0xff]
          %v855 = vld [vmem:[#allocation2 + $0x50] sm:$0xff]
          %v856 = vld [vmem:[#allocation2 + $0x58] sm:$0xff]
          %v857 = vld [vmem:[#allocation2 + $0x60] sm:$0xff]
          %v858 = vld [vmem:[#allocation2 + $0x68] sm:$0xff]
          %v859 = vld [vmem:[#allocation2 + $0x70] sm:$0xff]
          %v860 = vld [vmem:[#allocation2 + $0x78] sm:$0xff]
          %v861 = vld [vmem:[#allocation12] sm:$0xff]
          %v862 = vld [vmem:[#allocation12 + $0x8] sm:$0xff]
          %v863 = vld [vmem:[#allocation12 + $0x10] sm:$0xff]
          %v864 = vld [vmem:[#allocation12 + $0x18] sm:$0xff]
          %v865 = vld [vmem:[#allocation12 + $0x20] sm:$0xff]
          %v866 = vld [vmem:[#allocation12 + $0x28] sm:$0xff]
          %v867 = vld [vmem:[#allocation12 + $0x30] sm:$0xff]
          %v868 = vld [vmem:[#allocation12 + $0x38] sm:$0xff]
          %v869 = vld [vmem:[#allocation12 + $0x40] sm:$0xff]
          %v870 = vld [vmem:[#allocation12 + $0x48] sm:$0xff]
          %v871 = vld [vmem:[#allocation12 + $0x50] sm:$0xff]
          %v872 = vld [vmem:[#allocation12 + $0x58] sm:$0xff]
          %v873 = vld [vmem:[#allocation12 + $0x60] sm:$0xff]
          %v874 = vld [vmem:[#allocation12 + $0x68] sm:$0xff]
          %v875 = vld [vmem:[#allocation12 + $0x70] sm:$0xff]
          %v876 = vld [vmem:[#allocation12 + $0x78] sm:$0xff]
          %v877 = vmul.f32 %v845, %v861
          %v878 = vmul.f32 %v846, %v862
          %v879 = vmul.f32 %v847, %v863
          %v880 = vmul.f32 %v848, %v864
          %v881 = vmul.f32 %v849, %v865
          %v882 = vmul.f32 %v850, %v866
          %v883 = vmul.f32 %v851, %v867
          %v884 = vmul.f32 %v852, %v868
          %v885 = vmul.f32 %v853, %v869
          %v886 = vmul.f32 %v854, %v870
          %v887 = vmul.f32 %v855, %v871
          %v888 = vmul.f32 %v856, %v872
          %v889 = vmul.f32 %v857, %v873
          %v890 = vmul.f32 %v858, %v874
          %v891 = vmul.f32 %v859, %v875
          %v892 = vmul.f32 %v860, %v876
          %893 = vst [vmem:[%s413] sm:$0xff] %v877
          %894 = vst [vmem:[%s413 + $0x8] sm:$0xff] %v878
          %895 = vst [vmem:[%s413 + $0x10] sm:$0xff] %v879
          %896 = vst [vmem:[%s413 + $0x18] sm:$0xff] %v880
          %897 = vst [vmem:[%s413 + $0x20] sm:$0xff] %v881
          %898 = vst [vmem:[%s413 + $0x28] sm:$0xff] %v882
          %899 = vst [vmem:[%s413 + $0x30] sm:$0xff] %v883
          %900 = vst [vmem:[%s413 + $0x38] sm:$0xff] %v884
          %901 = vst [vmem:[%s413 + $0x40] sm:$0xff] %v885
          %902 = vst [vmem:[%s413 + $0x48] sm:$0xff] %v886
          %903 = vst [vmem:[%s413 + $0x50] sm:$0xff] %v887
          %904 = vst [vmem:[%s413 + $0x58] sm:$0xff] %v888
          %905 = vst [vmem:[%s413 + $0x60] sm:$0xff] %v889
          %906 = vst [vmem:[%s413 + $0x68] sm:$0xff] %v890
          %907 = vst [vmem:[%s413 + $0x70] sm:$0xff] %v891
          %908 = vst [vmem:[%s413 + $0x78] sm:$0xff] %v892
          %v909 = vld [vmem:[#allocation3] sm:$0x1]
          %910 = vst [vmem:[%s419] sm:$0x1] %v909
        $region68: #{tpu_custom_call.1} parent=39 // pred_fallthru
          _
        %s911 = sand.u32 %s177, 1
        %s912 = scalar_lea.sflag [#allocation6], %s911
        %s913 = sand.u32 %s177, 1
        %s914 = smul.addr %s913, 128
        %s915 = scalar_lea.vmem [#allocation13], %s914
        %s916 = sand.u32 %s203, 1
        %s917 = scalar_lea.sflag [#allocation15], %s916
        %s918 = sand.u32 %s203, 1
        %s919 = scalar_lea.vmem [#allocation14], %s918
        // Predicated region
        $region69: #{tpu_custom_call.1} parent=39 // pred_check
          %p920 = pneg %p187
        $region70: #{tpu_custom_call.1} parent=39 // pred_check_branch
          %922 = sbr.rel (%p920) target = $region72
        $region71: #{tpu_custom_call.1} parent=39 // pred_region
          %924 = vsyncadd %s912, 0
          %s925 = smul.addr %s35, 16
          %s926 = smul.addr %s925, 8
          %s927 = scalar_lea.hbm %s5, %s926
          %s928 = sshll.u32 %s915, 4
          %s929 = int_to_ptr.vmem [resolvable:$true] %s928
          %s930 = sshll.u32 %s927, 4
          %s931 = int_to_ptr.hbm [resolvable:$true] %s930
          %936 = dma.vmem_to_hbm [thread:$0]  %s929, 2048, %s931, %s912, 128, 128, 8
        $region72: #{tpu_custom_call.1} parent=39 // pred_fallthru
          _
        // Predicated region
        $region73: #{tpu_custom_call.1} parent=39 // pred_check
          %p937 = pneg %p213
        $region74: #{tpu_custom_call.1} parent=39 // pred_check_branch
          %939 = sbr.rel (%p937) target = $region76
        $region75: #{tpu_custom_call.1} parent=39 // pred_region
          %941 = vsyncadd %s917, 0
          %s942 = scalar_lea.hbm %s6, %s35
          %s944 = sshll.u32 %s919, 4
          %s945 = int_to_ptr.vmem [resolvable:$true] %s944
          %s946 = sshll.u32 %s942, 4
          %s947 = int_to_ptr.hbm [resolvable:$true] %s946
          %949 = dma.vmem_to_hbm [thread:$0]  %s945, 16, %s947, %s917
        $region76: #{tpu_custom_call.1} parent=39 // pred_fallthru
          _
      $region40: #{tpu_custom_call.1} parent=5 // pred_fallthru
        _
      %p950 = scmp.le.s32.totalorder 2, %s26
      // Predicated region
      $region77: #{tpu_custom_call.1} parent=5 // pred_check
        %p951 = pneg %p950
      $region78: #{tpu_custom_call.1} parent=5 // pred_check_branch
        %953 = sbr.rel (%p951) target = $region80
      $region79: #{tpu_custom_call.1} parent=5 // pred_region
        %s954 = ssub.s32 %s26, 2
        // Predicated region
        $region81: #{tpu_custom_call.1} parent=79 // pred_check
          %p955 = pneg %p193
        $region82: #{tpu_custom_call.1} parent=79 // pred_check_branch
          %957 = sbr.rel (%p955) target = $region84
        $region83: #{tpu_custom_call.1} parent=79 // pred_region
          %s958 = sand.u32 %s178, 1
          %s959 = scalar_lea.sflag [#allocation6], %s958
          %s960 = sand.u32 %s178, 1
          %s961 = smul.addr %s960, 128
          %s962 = scalar_lea.vmem [#allocation13], %s961
          %964 = dma.done %s959, 2048
        $region84: #{tpu_custom_call.1} parent=79 // pred_fallthru
          _
        // Predicated region
        $region85: #{tpu_custom_call.1} parent=79 // pred_check
          %p965 = pneg %p219
        $region86: #{tpu_custom_call.1} parent=79 // pred_check_branch
          %967 = sbr.rel (%p965) target = $region88
        $region87: #{tpu_custom_call.1} parent=79 // pred_region
          %s968 = sand.u32 %s204, 1
          %s969 = scalar_lea.sflag [#allocation15], %s968
          %s970 = sand.u32 %s204, 1
          %s971 = scalar_lea.vmem [#allocation14], %s970
          %973 = dma.done %s969, 16
        $region88: #{tpu_custom_call.1} parent=79 // pred_fallthru
          _
      $region80: #{tpu_custom_call.1} parent=5 // pred_fallthru
        _
    $region6: #{tpu_custom_call.1} parent=1 // loop_footer
      %s30 = sadd.s32 1, %s26
    $region7: #{tpu_custom_call.1} parent=1 // loop_footer_branch
      %25 = sbr.rel target = $region3
    $region8: #{tpu_custom_call.1} parent=1 // loop_exit
      _
    %974 = vsyncpa [#allocation5], 1
    %s975 = scalar_lea.sflag [#allocation5], 1
    %976 = vsyncpa %s975, 1
    %977 = vsyncpa [#allocation8], 1
    %s978 = scalar_lea.sflag [#allocation8], 1
    %979 = vsyncpa %s978, 1
    %980 = vsyncpa [#allocation11], 1
    %981 = vsyncpa [#allocation6], 1
    %s982 = scalar_lea.sflag [#allocation6], 1
    %983 = vsyncpa %s982, 1
    %984 = vsyncpa [#allocation15], 1
    %s985 = scalar_lea.sflag [#allocation15], 1
    %986 = vsyncpa %s985, 1

</llo_original>
